<compile_context>
chip_gen: v5e
topology: v5e:2x2
jax: 0.10.0
libtpu: 0.0.40
codegen_flags: <defaults>
</compile_context>

<pallas_src>
import functools
import math

import numpy as np

import jax
import jax.numpy as jnp
from jax.experimental import pallas as pl
from jax.experimental.pallas import tpu as pltpu


# ----------------------------------------------------------------------------
# Host-side (numpy) construction of the (out_size, in_size) interpolation
# matrices. These are compile-time constants under jit and exactly reproduce
# PyTorch's source-index math (antialias=False).
# ----------------------------------------------------------------------------
def _bilinear_matrix_np(out_size: int, in_size: int, align_corners: bool) -> np.ndarray:
    out_idx = np.arange(out_size, dtype=np.float64)
    if align_corners:
        # PyTorch uses scale = 0 when out_size == 1 under align_corners.
        scale = (in_size - 1) / (out_size - 1) if out_size > 1 else 0.0
        src = out_idx * scale
    else:
        scale = in_size / out_size
        src = (out_idx + 0.5) * scale - 0.5
        src = np.maximum(src, 0.0)  # PyTorch clamps negative source coords to 0
    i0 = np.clip(np.floor(src).astype(np.int64), 0, in_size - 1)
    i1 = np.minimum(i0 + 1, in_size - 1)
    lam = src - i0
    w = np.zeros((out_size, in_size), np.float64)
    rows = np.arange(out_size)
    np.add.at(w, (rows, i0), 1.0 - lam)
    np.add.at(w, (rows, i1), lam)
    return w.astype(np.float32)


def _nearest_matrix_np(out_size: int, in_size: int) -> np.ndarray:
    # PyTorch 'nearest' (legacy): src = floor(out_idx * in/out)
    out_idx = np.arange(out_size, dtype=np.float64)
    src = np.floor(out_idx * (in_size / out_size)).astype(np.int64)
    src = np.clip(src, 0, in_size - 1)
    w = np.zeros((out_size, in_size), np.float32)
    w[np.arange(out_size), src] = 1.0
    return w


# ----------------------------------------------------------------------------
# Kernels
# ----------------------------------------------------------------------------
def _interp_kron_kernel(x_ref, w_ref, o_ref):
    # x_ref: (b, Hi*Wi), w_ref: (Hi*Wi, Ho*Wo), o_ref: (b, Ho*Wo)
    y = jnp.dot(x_ref[...], w_ref[...], preferred_element_type=jnp.float32)
    o_ref[...] = y.astype(o_ref.dtype)


def _interp_sep_kernel(x_ref, wwt_ref, wh_ref, o_ref, t_ref):
    # x_ref : (b*Hi, Wi)   plane block, planes stacked along sublanes
    # wwt_ref: (Wi, Wo)    width-interp matrix, pre-transposed on the host
    # wh_ref : (Ho, Hi)    height-interp matrix
    # o_ref : (b*Ho, Wo)
    # t_ref : (b*Hi, Wo)   f32 scratch holding the W-stage result
    ho, hi = wh_ref.shape
    b = x_ref.shape[0] // hi

    # W-stage: ONE big MXU matmul over the whole plane block (M = b*Hi).
    t_ref[...] = jnp.dot(x_ref[...], wwt_ref[...],
                         preferred_element_type=jnp.float32)

    # Keep the intermediate in f32 (only the weights may be bf16) so the
    # separable path matches the kron path / f32 reference accuracy.
    wh = wh_ref[...].astype(jnp.float32)

    def h_stage(src, dst):
        t_i = t_ref[pl.ds(src, hi), :]                                # (Hi, Wo)
        y = jnp.dot(wh, t_i, preferred_element_type=jnp.float32)      # (Ho, Wo)
        o_ref[pl.ds(dst, ho), :] = y.astype(o_ref.dtype)

    if b <= 32:
        # Fully unrolled at trace time: static slices, LLO sees everything.
        for i in range(b):
            h_stage(i * hi, i * ho)
    else:
        align_i = math.gcd(hi, 8)
        align_o = math.gcd(ho, 8)

        def body(i, carry):
            h_stage(pl.multiple_of(i * hi, align_i),
                    pl.multiple_of(i * ho, align_o))
            return carry

        jax.lax.fori_loop(0, b, body, 0, unroll=8)


# ----------------------------------------------------------------------------
# Generation-aware sizing
# ----------------------------------------------------------------------------
@functools.lru_cache(maxsize=1)
def _hw_config():
    try:
        vmem_cap = int(pltpu.get_tpu_info().vmem_capacity_bytes)
    except Exception:  # pragma: no cover - conservative fallback
        vmem_cap = 128 * 1024 * 1024
    if vmem_cap >= 100 * 1024 * 1024:
        # v5e / v6e class: 128 MiB VMEM, one TensorCore per chip.
        # One big block per call beats splitting into extra pipeline steps.
        return {"data_budget": 48 << 20, "vmem_limit": 96 << 20, "min_steps": 1}
    # v7x class: 64 MiB VMEM per TensorCore, 2 TensorCores per chip.
    # Keep the working set small and give the grid >= 2 parallel steps.
    return {"data_budget": 20 << 20, "vmem_limit": 48 << 20, "min_steps": 2}


def _lcm(a: int, b: int) -> int:
    return a * b // math.gcd(a, b)


def _choose_block_planes_kron(p, per_plane_bytes, weight_bytes, budget,
                              min_steps, sub):
    # Weights are (conservatively) counted as double-buffered.
    avail = max(budget - 2 * weight_bytes, 2 * per_plane_bytes)
    b = max(1, avail // (2 * per_plane_bytes))
    if min_steps > 1 and p > 1:
        b = min(b, -(-p // min_steps))
    b = min(b, p)
    if b < p:
        if b >= 512:
            b = (b // 256) * 256        # MXU M-fill granularity for big blocks
        elif b >= sub:
            b = (b // sub) * sub        # sublane / bf16 packing granularity
        else:
            b = min(sub, p)
    return int(b)


def _choose_block_planes_sep(p, per_plane_bytes, weight_bytes, budget,
                             min_steps, h_in, h_out, sub):
    avail = max(budget - 2 * weight_bytes, per_plane_bytes)
    b = max(1, avail // per_plane_bytes)
    if min_steps > 1 and p > 1:
        b = min(b, -(-p // min_steps))
    b = min(b, p)
    # Sublane dims of the (b*Hi, Wi) / (b*Ho, Wo) blocks must be `sub`-aligned
    # unless the block spans the full array.
    q = _lcm(sub // math.gcd(h_in, sub), sub // math.gcd(h_out, sub))
    if b < p and b % q != 0:
        b = (b // q) * q
        if b == 0:
            b = min(q, p)
    return int(b)


# ----------------------------------------------------------------------------
# Public entry point
# ----------------------------------------------------------------------------
@functools.partial(jax.jit, static_argnames=("size", "mode", "align_corners"))
def interpolate(x, size, mode="bilinear", align_corners=False):
    """Pallas equivalent of torch.nn.functional.interpolate on NCHW input."""
    n, c, h_in, w_in = x.shape
    if isinstance(size, int):
        h_out = w_out = int(size)
    else:
        h_out, w_out = (int(s) for s in size)

    if mode == "bilinear":
        wh = _bilinear_matrix_np(h_out, h_in, align_corners)
        ww = _bilinear_matrix_np(w_out, w_in, align_corners)
    elif mode == "nearest":
        # PyTorch legacy 'nearest' (floor(out*in/out)), NOT 'nearest-exact'.
        wh = _nearest_matrix_np(h_out, h_in)
        ww = _nearest_matrix_np(w_out, w_in)
    else:
        # TODO(synk): bicubic/area/trilinear and antialias=True not implemented.
        raise NotImplementedError(f"mode={mode!r} not supported")

    cfg = _hw_config()
    cparams = pltpu.CompilerParams(
        dimension_semantics=("parallel",),
        vmem_limit_bytes=cfg["vmem_limit"],
    )

    p = n * c
    in_elems = h_in * w_in
    out_elems = h_out * w_out
    itemsize = x.dtype.itemsize
    is_bf16 = x.dtype == jnp.bfloat16
    sub = 16 if is_bf16 else 8

    # ---- path selection: fused kron matmul vs separable two-stage --------
    # 'nearest' kron weights are exactly 0/1 -> bf16 halves the weight DMA.
    kron_wdtype = jnp.bfloat16 if (is_bf16 or mode == "nearest") else jnp.float32
    kron_bytes = in_elems * out_elems * jnp.dtype(kron_wdtype).itemsize
    act_bytes = p * in_elems * itemsize
    kron_max = cfg["data_budget"] // 4
    # Take the kron path only when activation traffic amortizes the kron weight
    # DMA (relaxed 4x when w_out < 128, where the separable path would emit
    # masked sub-128-lane stores).
    traffic_ok = act_bytes >= kron_bytes // (4 if w_out < 128 else 1)
    use_kron = kron_bytes <= kron_max and traffic_ok

    if use_kron:
        wk = jnp.asarray(np.kron(wh, ww).T, dtype=kron_wdtype)    # (Hi*Wi, Ho*Wo)
        x2 = x.reshape(p, in_elems)
        per_plane = (in_elems + out_elems) * itemsize
        b = _choose_block_planes_kron(p, per_plane, kron_bytes,
                                      cfg["data_budget"], cfg["min_steps"], sub)
        out = pl.pallas_call(
            _interp_kron_kernel,
            out_shape=jax.ShapeDtypeStruct((p, out_elems), x.dtype),
            grid_spec=pltpu.PrefetchScalarGridSpec(
                num_scalar_prefetch=0,
                grid=(pl.cdiv(p, b),),
                in_specs=[
                    pl.BlockSpec((b, in_elems), lambda i: (i, 0)),
                    # Grid-invariant weight block (not re-DMA'd across steps).
                    # TODO(synk): pipeline_mode=pl.Buffered(1) would halve its
                    # VMEM footprint; the budget conservatively assumes 2 bufs.
                    pl.BlockSpec((in_elems, out_elems), lambda i: (0, 0)),
                ],
                out_specs=pl.BlockSpec((b, out_elems), lambda i: (i, 0)),
            ),
            compiler_params=cparams,
        )(x2, wk)
        return out.reshape(n, c, h_out, w_out)

    # ---- separable path: y = Wh @ x @ Ww^T ---------------------------------
    sep_wdtype = jnp.bfloat16 if is_bf16 else jnp.float32
    wh_d = jnp.asarray(wh, dtype=sep_wdtype)        # (Ho, Hi)
    wwt_d = jnp.asarray(ww.T, dtype=sep_wdtype)     # (Wi, Wo)
    x2 = x.reshape(p * h_in, w_in)                  # planes stacked along rows
    weight_bytes = (h_out * h_in + w_in * w_out) * jnp.dtype(sep_wdtype).itemsize
    # double-buffered in/out blocks + single f32 W-stage scratch, per plane
    per_plane = 2 * (in_elems + out_elems) * itemsize + h_in * w_out * 4
    b = _choose_block_planes_sep(p, per_plane, weight_bytes, cfg["data_budget"],
                                 cfg["min_steps"], h_in, h_out, sub)
    out = pl.pallas_call(
        _interp_sep_kernel,
        out_shape=jax.ShapeDtypeStruct((p * h_out, w_out), x.dtype),
        grid_spec=pltpu.PrefetchScalarGridSpec(
            num_scalar_prefetch=0,
            grid=(pl.cdiv(p, b),),
            in_specs=[
                pl.BlockSpec((b * h_in, w_in), lambda i: (i, 0)),
                pl.BlockSpec((w_in, w_out), lambda i: (0, 0)),
                pl.BlockSpec((h_out, h_in), lambda i: (0, 0)),
            ],
            out_specs=pl.BlockSpec((b * h_out, w_out), lambda i: (i, 0)),
            scratch_shapes=[pltpu.VMEM((b * h_in, w_out), jnp.float32)],
        ),
        compiler_params=cparams,
    )(x2, wwt_d, wh_d)
    return out.reshape(n, c, h_out, w_out)


class Interpolate:
    """Mirror of the PyTorch Interpolate module (forward pass only)."""

    def __init__(self, size, mode, align_corners=False):
        if isinstance(size, int):
            self.size = (int(size), int(size))
        else:
            self.size = tuple(int(s) for s in size)
        self.mode = mode
        self.align_corners = bool(align_corners)

    def __call__(self, x):
        return interpolate(x, self.size, self.mode, self.align_corners)

    def __str__(self):
        return (f"Interpolate(size={self.size},{self.mode},"
                f"align_corners={self.align_corners})")

    __repr__ = __str__


# ----------------------------------------------------------------------------
# Plain-JAX reference (same separable interpolation matrices)
# ----------------------------------------------------------------------------
def _reference(x, size, mode, align_corners):
    h_out, w_out = size
    _, _, h_in, w_in = x.shape
    if mode == "bilinear":
        wh = _bilinear_matrix_np(h_out, h_in, align_corners)
        ww = _bilinear_matrix_np(w_out, w_in, align_corners)
    else:
        wh = _nearest_matrix_np(h_out, h_in)
        ww = _nearest_matrix_np(w_out, w_in)
    y = jnp.einsum("oh,nchw,pw->ncop", jnp.asarray(wh),
                   x.astype(jnp.float32), jnp.asarray(ww))
    return y.astype(x.dtype)


if __name__ == "__main__":
    key = jax.random.PRNGKey(0)
    k1, k2, k3 = jax.random.split(key, 3)

    # GAN-feature-map-like input (tiny p -> separable path, 4 KB weights).
    x_small = jax.random.normal(k1, (2, 4, 16, 16), dtype=jnp.float32)
    # Larger spatial size (kron weight too big -> separable path).
    x_mid = jax.random.normal(k2, (1, 2, 24, 24), dtype=jnp.float32)
    # Many planes: activation traffic amortizes the kron weight -> kron path.
    x_many = jax.random.normal(k3, (8, 64, 16, 16), dtype=jnp.float32)

    cases = [
        (x_small, (32, 32), "bilinear", False, 1e-5),
        (x_small, (32, 32), "bilinear", True, 1e-5),
        (x_small, (32, 32), "nearest", False, 1e-5),
        (x_small.astype(jnp.bfloat16), (32, 32), "nearest", False, 1e-2),
        (x_mid, (48, 48), "bilinear", False, 1e-5),
        (x_many, (32, 32), "bilinear", False, 1e-5),
    ]

    for xin, size, mode, ac, tol in cases:
        mod = Interpolate(size=size, mode=mode, align_corners=ac)
        y = jax.block_until_ready(mod(xin))
        nn, cc, _, _ = xin.shape
        assert y.shape == (nn, cc, size[0], size[1]) and y.dtype == xin.dtype
        ref = _reference(xin, size, mode, ac)
        assert jnp.allclose(y.astype(jnp.float32), ref.astype(jnp.float32),
                            atol=tol, rtol=tol), (size, mode, ac)

    print("KERNEL_OK")
</pallas_src>

<mosaic_0001>
module attributes {stable_mosaic.version = 11 : i64} {
  func.func @_interp_sep_kernel(%arg0: i32, %arg1: memref<128x16xf32, #tpu.memory_space<vmem>>, %arg2: memref<16x32xf32, #tpu.memory_space<vmem>>, %arg3: memref<32x16xf32, #tpu.memory_space<vmem>>, %arg4: memref<256x32xf32, #tpu.memory_space<vmem>>, %arg5: memref<128x32xf32, #tpu.memory_space<vmem>>) attributes {dimension_semantics = [#tpu.dimension_semantics<parallel>], iteration_bounds = array<i64: 1>, scalar_prefetch = 0 : i64, scratch_operands = 1 : i64, tpu.core_type = #tpu.core_type<tc>, window_params = [{transform_indices = @transform_0, window_bounds = array<i64: 128, 16>}, {pipeline_mode = #tpu.pipeline_mode<synchronous>, transform_indices = @transform_1, window_bounds = array<i64: 16, 32>}, {pipeline_mode = #tpu.pipeline_mode<synchronous>, transform_indices = @transform_2, window_bounds = array<i64: 32, 16>}, {transform_indices = @transform_3, window_bounds = array<i64: 256, 32>}]} {
    %c0 = arith.constant 0 : index
    %c0_0 = arith.constant 0 : index
    %0 = vector.load %arg1[%c0, %c0_0] : memref<128x16xf32, #tpu.memory_space<vmem>>, vector<128x16xf32>
    %c0_1 = arith.constant 0 : index
    %c0_2 = arith.constant 0 : index
    %1 = vector.load %arg2[%c0_1, %c0_2] : memref<16x32xf32, #tpu.memory_space<vmem>>, vector<16x32xf32>
    %cst = arith.constant dense<0.000000e+00> : vector<128x32xf32>
    %2 = tpu.matmul %0, %1, %cst {dimension_numbers = #tpu.dot_dimension_numbers<[1], [0], [0], [1], [0, 0, 1, 1], [], []>} : vector<128x16xf32>, vector<16x32xf32>, vector<128x32xf32> -> vector<128x32xf32>
    %c0_3 = arith.constant 0 : index
    %c0_4 = arith.constant 0 : index
    %3 = vector.load %arg5[%c0_3, %c0_4] : memref<128x32xf32, #tpu.memory_space<vmem>>, vector<128x32xf32>
    tpu.vector_store %arg5[%c0_3, %c0_4], %2 {strides = array<i32>} : memref<128x32xf32, #tpu.memory_space<vmem>>, vector<128x32xf32>,
    %c0_5 = arith.constant 0 : index
    %c0_6 = arith.constant 0 : index
    %4 = vector.load %arg3[%c0_5, %c0_6] : memref<32x16xf32, #tpu.memory_space<vmem>>, vector<32x16xf32>
    %c0_7 = arith.constant 0 : index
    %c0_8 = arith.constant 0 : index
    %5 = vector.load %arg5[%c0_7, %c0_8] : memref<128x32xf32, #tpu.memory_space<vmem>>, vector<16x32xf32>
    %cst_9 = arith.constant dense<0.000000e+00> : vector<32x32xf32>
    %6 = tpu.matmul %4, %5, %cst_9 {dimension_numbers = #tpu.dot_dimension_numbers<[1], [0], [0], [1], [0, 0, 1, 1], [], []>} : vector<32x16xf32>, vector<16x32xf32>, vector<32x32xf32> -> vector<32x32xf32>
    %c0_10 = arith.constant 0 : index
    %c0_11 = arith.constant 0 : index
    %7 = vector.load %arg4[%c0_10, %c0_11] : memref<256x32xf32, #tpu.memory_space<vmem>>, vector<32x32xf32>
    tpu.vector_store %arg4[%c0_10, %c0_11], %6 {strides = array<i32>} : memref<256x32xf32, #tpu.memory_space<vmem>>, vector<32x32xf32>,
    %c16 = arith.constant 16 : index
    %c0_12 = arith.constant 0 : index
    %8 = vector.load %arg5[%c16, %c0_12] : memref<128x32xf32, #tpu.memory_space<vmem>>, vector<16x32xf32>
    %cst_13 = arith.constant dense<0.000000e+00> : vector<32x32xf32>
    %9 = tpu.matmul %4, %8, %cst_13 {dimension_numbers = #tpu.dot_dimension_numbers<[1], [0], [0], [1], [0, 0, 1, 1], [], []>} : vector<32x16xf32>, vector<16x32xf32>, vector<32x32xf32> -> vector<32x32xf32>
    %c32 = arith.constant 32 : index
    %c0_14 = arith.constant 0 : index
    %10 = vector.load %arg4[%c32, %c0_14] : memref<256x32xf32, #tpu.memory_space<vmem>>, vector<32x32xf32>
    tpu.vector_store %arg4[%c32, %c0_14], %9 {strides = array<i32>} : memref<256x32xf32, #tpu.memory_space<vmem>>, vector<32x32xf32>,
    %c32_15 = arith.constant 32 : index
    %c0_16 = arith.constant 0 : index
    %11 = vector.load %arg5[%c32_15, %c0_16] : memref<128x32xf32, #tpu.memory_space<vmem>>, vector<16x32xf32>
    %cst_17 = arith.constant dense<0.000000e+00> : vector<32x32xf32>
    %12 = tpu.matmul %4, %11, %cst_17 {dimension_numbers = #tpu.dot_dimension_numbers<[1], [0], [0], [1], [0, 0, 1, 1], [], []>} : vector<32x16xf32>, vector<16x32xf32>, vector<32x32xf32> -> vector<32x32xf32>
    %c64 = arith.constant 64 : index
    %c0_18 = arith.constant 0 : index
    %13 = vector.load %arg4[%c64, %c0_18] : memref<256x32xf32, #tpu.memory_space<vmem>>, vector<32x32xf32>
    tpu.vector_store %arg4[%c64, %c0_18], %12 {strides = array<i32>} : memref<256x32xf32, #tpu.memory_space<vmem>>, vector<32x32xf32>,
    %c48 = arith.constant 48 : index
    %c0_19 = arith.constant 0 : index
    %14 = vector.load %arg5[%c48, %c0_19] : memref<128x32xf32, #tpu.memory_space<vmem>>, vector<16x32xf32>
    %cst_20 = arith.constant dense<0.000000e+00> : vector<32x32xf32>
    %15 = tpu.matmul %4, %14, %cst_20 {dimension_numbers = #tpu.dot_dimension_numbers<[1], [0], [0], [1], [0, 0, 1, 1], [], []>} : vector<32x16xf32>, vector<16x32xf32>, vector<32x32xf32> -> vector<32x32xf32>
    %c96 = arith.constant 96 : index
    %c0_21 = arith.constant 0 : index
    %16 = vector.load %arg4[%c96, %c0_21] : memref<256x32xf32, #tpu.memory_space<vmem>>, vector<32x32xf32>
    tpu.vector_store %arg4[%c96, %c0_21], %15 {strides = array<i32>} : memref<256x32xf32, #tpu.memory_space<vmem>>, vector<32x32xf32>,
    %c64_22 = arith.constant 64 : index
    %c0_23 = arith.constant 0 : index
    %17 = vector.load %arg5[%c64_22, %c0_23] : memref<128x32xf32, #tpu.memory_space<vmem>>, vector<16x32xf32>
    %cst_24 = arith.constant dense<0.000000e+00> : vector<32x32xf32>
    %18 = tpu.matmul %4, %17, %cst_24 {dimension_numbers = #tpu.dot_dimension_numbers<[1], [0], [0], [1], [0, 0, 1, 1], [], []>} : vector<32x16xf32>, vector<16x32xf32>, vector<32x32xf32> -> vector<32x32xf32>
    %c128 = arith.constant 128 : index
    %c0_25 = arith.constant 0 : index
    %19 = vector.load %arg4[%c128, %c0_25] : memref<256x32xf32, #tpu.memory_space<vmem>>, vector<32x32xf32>
    tpu.vector_store %arg4[%c128, %c0_25], %18 {strides = array<i32>} : memref<256x32xf32, #tpu.memory_space<vmem>>, vector<32x32xf32>,
    %c80 = arith.constant 80 : index
    %c0_26 = arith.constant 0 : index
    %20 = vector.load %arg5[%c80, %c0_26] : memref<128x32xf32, #tpu.memory_space<vmem>>, vector<16x32xf32>
    %cst_27 = arith.constant dense<0.000000e+00> : vector<32x32xf32>
    %21 = tpu.matmul %4, %20, %cst_27 {dimension_numbers = #tpu.dot_dimension_numbers<[1], [0], [0], [1], [0, 0, 1, 1], [], []>} : vector<32x16xf32>, vector<16x32xf32>, vector<32x32xf32> -> vector<32x32xf32>
    %c160 = arith.constant 160 : index
    %c0_28 = arith.constant 0 : index
    %22 = vector.load %arg4[%c160, %c0_28] : memref<256x32xf32, #tpu.memory_space<vmem>>, vector<32x32xf32>
    tpu.vector_store %arg4[%c160, %c0_28], %21 {strides = array<i32>} : memref<256x32xf32, #tpu.memory_space<vmem>>, vector<32x32xf32>,
    %c96_29 = arith.constant 96 : index
    %c0_30 = arith.constant 0 : index
    %23 = vector.load %arg5[%c96_29, %c0_30] : memref<128x32xf32, #tpu.memory_space<vmem>>, vector<16x32xf32>
    %cst_31 = arith.constant dense<0.000000e+00> : vector<32x32xf32>
    %24 = tpu.matmul %4, %23, %cst_31 {dimension_numbers = #tpu.dot_dimension_numbers<[1], [0], [0], [1], [0, 0, 1, 1], [], []>} : vector<32x16xf32>, vector<16x32xf32>, vector<32x32xf32> -> vector<32x32xf32>
    %c192 = arith.constant 192 : index
    %c0_32 = arith.constant 0 : index
    %25 = vector.load %arg4[%c192, %c0_32] : memref<256x32xf32, #tpu.memory_space<vmem>>, vector<32x32xf32>
    tpu.vector_store %arg4[%c192, %c0_32], %24 {strides = array<i32>} : memref<256x32xf32, #tpu.memory_space<vmem>>, vector<32x32xf32>,
    %c112 = arith.constant 112 : index
    %c0_33 = arith.constant 0 : index
    %26 = vector.load %arg5[%c112, %c0_33] : memref<128x32xf32, #tpu.memory_space<vmem>>, vector<16x32xf32>
    %cst_34 = arith.constant dense<0.000000e+00> : vector<32x32xf32>
    %27 = tpu.matmul %4, %26, %cst_34 {dimension_numbers = #tpu.dot_dimension_numbers<[1], [0], [0], [1], [0, 0, 1, 1], [], []>} : vector<32x16xf32>, vector<16x32xf32>, vector<32x32xf32> -> vector<32x32xf32>
    %c224 = arith.constant 224 : index
    %c0_35 = arith.constant 0 : index
    %28 = vector.load %arg4[%c224, %c0_35] : memref<256x32xf32, #tpu.memory_space<vmem>>, vector<32x32xf32>
    tpu.vector_store %arg4[%c224, %c0_35], %27 {strides = array<i32>} : memref<256x32xf32, #tpu.memory_space<vmem>>, vector<32x32xf32>,
    return
  }
  func.func @transform_0(%arg0: i32) -> (i32, i32) {
    %c0_i32 = arith.constant 0 : i32
    %c0_i32_0 = arith.constant 0 : i32
    return %arg0, %c0_i32 : i32, i32
  }
  func.func @transform_1(%arg0: i32) -> (i32, i32) {
    %c0_i32 = arith.constant 0 : i32
    %c0_i32_0 = arith.constant 0 : i32
    %c0_i32_1 = arith.constant 0 : i32
    return %c0_i32, %c0_i32_0 : i32, i32
  }
  func.func @transform_2(%arg0: i32) -> (i32, i32) {
    %c0_i32 = arith.constant 0 : i32
    %c0_i32_0 = arith.constant 0 : i32
    %c0_i32_1 = arith.constant 0 : i32
    return %c0_i32, %c0_i32_0 : i32, i32
  }
  func.func @transform_3(%arg0: i32) -> (i32, i32) {
    %c0_i32 = arith.constant 0 : i32
    %c0_i32_0 = arith.constant 0 : i32
    return %arg0, %c0_i32 : i32, i32
  }
}

</mosaic_0001>

<llo_original>
// kernel: interpolate.1
$region0: #{interpolate.1}
  #allocation0 [shape = 'u32[]', space=smem, size = 0x4, offset = 0x4, fixed_abs, tag = 'smem constant byte address 0x4 - core index']
  #allocation1 [shape = 'u32[72,128]{1,0:T(1,128)}', space=vmem, size = 0x9000, scoped, tag = 'internal scratch']
  #allocation2 [shape = 'f32[128,32]{1,0:T(8,128)}', space=vmem, size = 0x10000, scoped, tag = 'scratch operand']
  %s0 = inlined_call_operand.hbm [shape: f32[128,16], index: 0, kind: input, shape index: {}]
  %s1 = inlined_call_operand.hbm [shape: f32[16,32], index: 1, kind: input, shape index: {}]
  %s2 = inlined_call_operand.hbm [shape: f32[32,16], index: 2, kind: input, shape index: {}]
  %s3 = inlined_call_operand.hbm [shape: f32[256,32], index: 3, kind: output, shape index: {}]
  %s4 = sld [smem:[#allocation0]]
  $region34: #{interpolate.1} parent=0
    _
  %s6 = ssub.s32 1, %s4
  %s7 = scalar_select 0, %s6, %s4
  $region1: #{interpolate.1} parent=0
    #allocation3 [shape = 'u8[65536]{0}', space=vmem, size = 0x10000, scoped, tag = 'input window, operand 0, single buffered']
    #allocation4 [shape = 's32[1]{0}', space=sflag, size = 0x4, scoped, tag = 'scoped memory for interpolate.1']
    #allocation5 [shape = 's32[1]{0}', space=sflag, size = 0x4, scoped, tag = 'scoped memory for interpolate.1']
    #allocation6 [shape = 'u8[8192]{0}', space=vmem, size = 0x2000, scoped, tag = 'input window, operand 1, single buffered']
    #allocation7 [shape = 's32[1]{0}', space=sflag, size = 0x4, scoped, tag = 'scoped memory for interpolate.1']
    #allocation8 [shape = 'u8[16384]{0}', space=vmem, size = 0x4000, scoped, tag = 'input window, operand 2, single buffered']
    #allocation9 [shape = 'u8[131072]{0}', space=vmem, size = 0x20000, scoped, tag = 'output window, operand 0, single buffered']
    %8 = vsyncpa [#allocation4], 0
    %9 = vsyncpa [#allocation7], 0
    %10 = vsyncpa [#allocation5], 0
    // Predicated region
    $region2: #{interpolate.1} parent=1 // pred_check
      _
    $region3: #{interpolate.1} parent=1 // pred_check_branch
      %12 = sbr.rel (0) target = $region5
    $region4: #{interpolate.1} parent=1 // pred_region
      %14 = vsyncadd [#allocation4], 0
      %s15 = sshll.u32 %s0, 4
      %s16 = int_to_ptr.hbm [resolvable:$true] %s15
      %s17 = sshll.u32 [#allocation3], 4
      %s18 = int_to_ptr.vmem [resolvable:$true] %s17
      %23 = dma.hbm_to_vmem [thread:$0]  %s16, 2048, %s18, [#allocation4], 128, 128, 8
    $region5: #{interpolate.1} parent=1 // pred_fallthru
      _
    // Predicated region
    $region6: #{interpolate.1} parent=1 // pred_check
      _
    $region7: #{interpolate.1} parent=1 // pred_check_branch
      %25 = sbr.rel (0) target = $region9
    $region8: #{interpolate.1} parent=1 // pred_region
      %27 = vsyncadd [#allocation7], 0
      %s28 = sshll.u32 %s1, 4
      %s29 = int_to_ptr.hbm [resolvable:$true] %s28
      %s30 = sshll.u32 [#allocation6], 4
      %s31 = int_to_ptr.vmem [resolvable:$true] %s30
      %36 = dma.hbm_to_vmem [thread:$0]  %s29, 256, %s31, [#allocation7], 128, 128, 8
    $region9: #{interpolate.1} parent=1 // pred_fallthru
      _
    // Predicated region
    $region10: #{interpolate.1} parent=1 // pred_check
      _
    $region11: #{interpolate.1} parent=1 // pred_check_branch
      %38 = sbr.rel (0) target = $region13
    $region12: #{interpolate.1} parent=1 // pred_region
      %40 = vsyncadd [#allocation7], 0
      %s41 = sshll.u32 %s2, 4
      %s42 = int_to_ptr.hbm [resolvable:$true] %s41
      %s43 = sshll.u32 [#allocation8], 4
      %s44 = int_to_ptr.vmem [resolvable:$true] %s43
      %49 = dma.hbm_to_vmem [thread:$0]  %s42, 512, %s44, [#allocation7], 128, 128, 8
    $region13: #{interpolate.1} parent=1 // pred_fallthru
      _
    // Predicated region
    $region14: #{interpolate.1} parent=1 // pred_check
      _
    $region15: #{interpolate.1} parent=1 // pred_check_branch
      %51 = sbr.rel (0) target = $region17
    $region16: #{interpolate.1} parent=1 // pred_region
      %53 = dma.done [#allocation4], 2048
    $region17: #{interpolate.1} parent=1 // pred_fallthru
      _
    // Predicated region
    $region18: #{interpolate.1} parent=1 // pred_check
      _
    $region19: #{interpolate.1} parent=1 // pred_check_branch
      %55 = sbr.rel (0) target = $region21
    $region20: #{interpolate.1} parent=1 // pred_region
      %57 = dma.done [#allocation7], 256
    $region21: #{interpolate.1} parent=1 // pred_fallthru
      _
    // Predicated region
    $region22: #{interpolate.1} parent=1 // pred_check
      _
    $region23: #{interpolate.1} parent=1 // pred_check_branch
      %59 = sbr.rel (0) target = $region25
    $region24: #{interpolate.1} parent=1 // pred_region
      %61 = dma.done [#allocation7], 512
    $region25: #{interpolate.1} parent=1 // pred_fallthru
      _
    %v62 = vld [vmem:[#allocation3] sm:$0xff]
    %v63 = vld [vmem:[#allocation3 + $0x8] sm:$0xff]
    %v64 = vld [vmem:[#allocation3 + $0x10] sm:$0xff]
    %v65 = vld [vmem:[#allocation3 + $0x18] sm:$0xff]
    %v66 = vld [vmem:[#allocation3 + $0x20] sm:$0xff]
    %v67 = vld [vmem:[#allocation3 + $0x28] sm:$0xff]
    %v68 = vld [vmem:[#allocation3 + $0x30] sm:$0xff]
    %v69 = vld [vmem:[#allocation3 + $0x38] sm:$0xff]
    %v70 = vld [vmem:[#allocation3 + $0x40] sm:$0xff]
    %v71 = vld [vmem:[#allocation3 + $0x48] sm:$0xff]
    %v72 = vld [vmem:[#allocation3 + $0x50] sm:$0xff]
    %v73 = vld [vmem:[#allocation3 + $0x58] sm:$0xff]
    %v74 = vld [vmem:[#allocation3 + $0x60] sm:$0xff]
    %v75 = vld [vmem:[#allocation3 + $0x68] sm:$0xff]
    %v76 = vld [vmem:[#allocation3 + $0x70] sm:$0xff]
    %v77 = vld [vmem:[#allocation3 + $0x78] sm:$0xff]
    %v78 = vld [vmem:[#allocation6] sm:$0xff]
    %v79 = vld [vmem:[#allocation6 + $0x8] sm:$0xff]
    %vm80 = vcmask 130048
    %v82 = vsel %vm80, %v62, 0
    %v85 = vsel %vm80, %v63, 0
    %v88 = vsel %vm80, %v64, 0
    %v91 = vsel %vm80, %v65, 0
    %v94 = vsel %vm80, %v66, 0
    %v97 = vsel %vm80, %v67, 0
    %v100 = vsel %vm80, %v68, 0
    %v103 = vsel %vm80, %v69, 0
    %v106 = vsel %vm80, %v70, 0
    %v109 = vsel %vm80, %v71, 0
    %v112 = vsel %vm80, %v72, 0
    %v115 = vsel %vm80, %v73, 0
    %v118 = vsel %vm80, %v74, 0
    %v121 = vsel %vm80, %v75, 0
    %v124 = vsel %vm80, %v76, 0
    %v127 = vsel %vm80, %v77, 0
    %129 = vmatpush.msra.mxu0 0.0
    %130 = vmatpush.msra.mxu0 0.0
    %131 = vmatpush.msra.mxu0 0.0
    %132 = vmatpush.msra.mxu0 0.0
    %133 = vmatpush.msra.mxu0 0.0
    %134 = vmatpush.msra.mxu0 0.0
    %135 = vmatpush.msra.mxu0 0.0
    %136 = vmatpush.msra.mxu0 0.0
    %137 = vmatpush.msra.mxu0 0.0
    %138 = vmatpush.msra.mxu0 0.0
    %139 = vmatpush.msra.mxu0 0.0
    %140 = vmatpush.msra.mxu0 0.0
    %141 = vmatpush.msra.mxu0 0.0
    %142 = vmatpush.msra.mxu0 0.0
    %143 = vmatpush.msra.mxu0 %v79
    %144 = vmatpush.msra.mxu0 %v78
    %145 = vmatmul.f32.gmra.mxu0 %v82
    %v146 = vpop.f32.mrf.mxu0
    %v147 = vadd.f32 0.0, %v146
    %148 = vmatmul.f32.gmra.mxu0 %v85
    %v149 = vpop.f32.mrf.mxu0
    %v150 = vadd.f32 0.0, %v149
    %151 = vmatmul.f32.gmra.mxu0 %v88
    %v152 = vpop.f32.mrf.mxu0
    %v153 = vadd.f32 0.0, %v152
    %154 = vmatmul.f32.gmra.mxu0 %v91
    %v155 = vpop.f32.mrf.mxu0
    %v156 = vadd.f32 0.0, %v155
    %157 = vmatmul.f32.gmra.mxu0 %v94
    %v158 = vpop.f32.mrf.mxu0
    %v159 = vadd.f32 0.0, %v158
    %160 = vmatmul.f32.gmra.mxu0 %v97
    %v161 = vpop.f32.mrf.mxu0
    %v162 = vadd.f32 0.0, %v161
    %163 = vmatmul.f32.gmra.mxu0 %v100
    %v164 = vpop.f32.mrf.mxu0
    %v165 = vadd.f32 0.0, %v164
    %166 = vmatmul.f32.gmra.mxu0 %v103
    %v167 = vpop.f32.mrf.mxu0
    %v168 = vadd.f32 0.0, %v167
    %169 = vmatmul.f32.gmra.mxu0 %v106
    %v170 = vpop.f32.mrf.mxu0
    %v171 = vadd.f32 0.0, %v170
    %172 = vmatmul.f32.gmra.mxu0 %v109
    %v173 = vpop.f32.mrf.mxu0
    %v174 = vadd.f32 0.0, %v173
    %175 = vmatmul.f32.gmra.mxu0 %v112
    %v176 = vpop.f32.mrf.mxu0
    %v177 = vadd.f32 0.0, %v176
    %178 = vmatmul.f32.gmra.mxu0 %v115
    %v179 = vpop.f32.mrf.mxu0
    %v180 = vadd.f32 0.0, %v179
    %181 = vmatmul.f32.gmra.mxu0 %v118
    %v182 = vpop.f32.mrf.mxu0
    %v183 = vadd.f32 0.0, %v182
    %184 = vmatmul.f32.gmra.mxu0 %v121
    %v185 = vpop.f32.mrf.mxu0
    %v186 = vadd.f32 0.0, %v185
    %187 = vmatmul.f32.gmra.mxu0 %v124
    %v188 = vpop.f32.mrf.mxu0
    %v189 = vadd.f32 0.0, %v188
    %190 = vmatmul.f32.gmra.mxu0 %v127
    %v191 = vpop.f32.mrf.mxu0
    %v192 = vadd.f32 0.0, %v191
    %193 = vdwg.mxu0
    %vm194 = vcmask 261120
    %195 = vst.msk [vmem:[#allocation2] sm:$0xff] %vm194, %v147
    %196 = vst.msk [vmem:[#allocation2 + $0x8] sm:$0xff] %vm194, %v150
    %197 = vst.msk [vmem:[#allocation2 + $0x10] sm:$0xff] %vm194, %v153
    %198 = vst.msk [vmem:[#allocation2 + $0x18] sm:$0xff] %vm194, %v156
    %199 = vst.msk [vmem:[#allocation2 + $0x20] sm:$0xff] %vm194, %v159
    %200 = vst.msk [vmem:[#allocation2 + $0x28] sm:$0xff] %vm194, %v162
    %201 = vst.msk [vmem:[#allocation2 + $0x30] sm:$0xff] %vm194, %v165
    %202 = vst.msk [vmem:[#allocation2 + $0x38] sm:$0xff] %vm194, %v168
    %203 = vst.msk [vmem:[#allocation2 + $0x40] sm:$0xff] %vm194, %v171
    %204 = vst.msk [vmem:[#allocation2 + $0x48] sm:$0xff] %vm194, %v174
    %205 = vst.msk [vmem:[#allocation2 + $0x50] sm:$0xff] %vm194, %v177
    %206 = vst.msk [vmem:[#allocation2 + $0x58] sm:$0xff] %vm194, %v180
    %207 = vst.msk [vmem:[#allocation2 + $0x60] sm:$0xff] %vm194, %v183
    %208 = vst.msk [vmem:[#allocation2 + $0x68] sm:$0xff] %vm194, %v186
    %209 = vst.msk [vmem:[#allocation2 + $0x70] sm:$0xff] %vm194, %v189
    %210 = vst.msk [vmem:[#allocation2 + $0x78] sm:$0xff] %vm194, %v192
    %v211 = vld [vmem:[#allocation8] sm:$0xff]
    %v212 = vld [vmem:[#allocation8 + $0x8] sm:$0xff]
    %v213 = vld [vmem:[#allocation8 + $0x10] sm:$0xff]
    %v214 = vld [vmem:[#allocation8 + $0x18] sm:$0xff]
    %v215 = vld [vmem:[#allocation2] sm:$0xff]
    %v216 = vld [vmem:[#allocation2 + $0x8] sm:$0xff]
    %v218 = vsel %vm80, %v211, 0
    %v221 = vsel %vm80, %v212, 0
    %v224 = vsel %vm80, %v213, 0
    %v227 = vsel %vm80, %v214, 0
    %229 = vmatpush.msra.mxu0 0.0
    %230 = vmatpush.msra.mxu0 0.0
    %231 = vmatpush.msra.mxu0 0.0
    %232 = vmatpush.msra.mxu0 0.0
    %233 = vmatpush.msra.mxu0 0.0
    %234 = vmatpush.msra.mxu0 0.0
    %235 = vmatpush.msra.mxu0 0.0
    %236 = vmatpush.msra.mxu0 0.0
    %237 = vmatpush.msra.mxu0 0.0
    %238 = vmatpush.msra.mxu0 0.0
    %239 = vmatpush.msra.mxu0 0.0
    %240 = vmatpush.msra.mxu0 0.0
    %241 = vmatpush.msra.mxu0 0.0
    %242 = vmatpush.msra.mxu0 0.0
    %243 = vmatpush.msra.mxu0 %v216
    %244 = vmatpush.msra.mxu0 %v215
    %245 = vmatmul.f32.gmra.mxu0 %v218
    %v246 = vpop.f32.mrf.mxu0
    %v247 = vadd.f32 0.0, %v246
    %248 = vmatmul.f32.gmra.mxu0 %v221
    %v249 = vpop.f32.mrf.mxu0
    %v250 = vadd.f32 0.0, %v249
    %251 = vmatmul.f32.gmra.mxu0 %v224
    %v252 = vpop.f32.mrf.mxu0
    %v253 = vadd.f32 0.0, %v252
    %254 = vmatmul.f32.gmra.mxu0 %v227
    %v255 = vpop.f32.mrf.mxu0
    %v256 = vadd.f32 0.0, %v255
    %257 = vdwg.mxu0
    %258 = vst.msk [vmem:[#allocation9] sm:$0xff] %vm194, %v247
    %259 = vst.msk [vmem:[#allocation9 + $0x8] sm:$0xff] %vm194, %v250
    %260 = vst.msk [vmem:[#allocation9 + $0x10] sm:$0xff] %vm194, %v253
    %261 = vst.msk [vmem:[#allocation9 + $0x18] sm:$0xff] %vm194, %v256
    %v262 = vld [vmem:[#allocation2 + $0x10] sm:$0xff]
    %v263 = vld [vmem:[#allocation2 + $0x18] sm:$0xff]
    %264 = vmatpush.msra.mxu0 0.0
    %265 = vmatpush.msra.mxu0 0.0
    %266 = vmatpush.msra.mxu0 0.0
    %267 = vmatpush.msra.mxu0 0.0
    %268 = vmatpush.msra.mxu0 0.0
    %269 = vmatpush.msra.mxu0 0.0
    %270 = vmatpush.msra.mxu0 0.0
    %271 = vmatpush.msra.mxu0 0.0
    %272 = vmatpush.msra.mxu0 0.0
    %273 = vmatpush.msra.mxu0 0.0
    %274 = vmatpush.msra.mxu0 0.0
    %275 = vmatpush.msra.mxu0 0.0
    %276 = vmatpush.msra.mxu0 0.0
    %277 = vmatpush.msra.mxu0 0.0
    %278 = vmatpush.msra.mxu0 %v263
    %279 = vmatpush.msra.mxu0 %v262
    %280 = vmatmul.f32.gmra.mxu0 %v218
    %v281 = vpop.f32.mrf.mxu0
    %v282 = vadd.f32 0.0, %v281
    %283 = vmatmul.f32.gmra.mxu0 %v221
    %v284 = vpop.f32.mrf.mxu0
    %v285 = vadd.f32 0.0, %v284
    %286 = vmatmul.f32.gmra.mxu0 %v224
    %v287 = vpop.f32.mrf.mxu0
    %v288 = vadd.f32 0.0, %v287
    %289 = vmatmul.f32.gmra.mxu0 %v227
    %v290 = vpop.f32.mrf.mxu0
    %v291 = vadd.f32 0.0, %v290
    %292 = vdwg.mxu0
    %293 = vst.msk [vmem:[#allocation9 + $0x20] sm:$0xff] %vm194, %v282
    %294 = vst.msk [vmem:[#allocation9 + $0x28] sm:$0xff] %vm194, %v285
    %295 = vst.msk [vmem:[#allocation9 + $0x30] sm:$0xff] %vm194, %v288
    %296 = vst.msk [vmem:[#allocation9 + $0x38] sm:$0xff] %vm194, %v291
    %v297 = vld [vmem:[#allocation2 + $0x20] sm:$0xff]
    %v298 = vld [vmem:[#allocation2 + $0x28] sm:$0xff]
    %299 = vmatpush.msra.mxu0 0.0
    %300 = vmatpush.msra.mxu0 0.0
    %301 = vmatpush.msra.mxu0 0.0
    %302 = vmatpush.msra.mxu0 0.0
    %303 = vmatpush.msra.mxu0 0.0
    %304 = vmatpush.msra.mxu0 0.0
    %305 = vmatpush.msra.mxu0 0.0
    %306 = vmatpush.msra.mxu0 0.0
    %307 = vmatpush.msra.mxu0 0.0
    %308 = vmatpush.msra.mxu0 0.0
    %309 = vmatpush.msra.mxu0 0.0
    %310 = vmatpush.msra.mxu0 0.0
    %311 = vmatpush.msra.mxu0 0.0
    %312 = vmatpush.msra.mxu0 0.0
    %313 = vmatpush.msra.mxu0 %v298
    %314 = vmatpush.msra.mxu0 %v297
    %315 = vmatmul.f32.gmra.mxu0 %v218
    %v316 = vpop.f32.mrf.mxu0
    %v317 = vadd.f32 0.0, %v316
    %318 = vmatmul.f32.gmra.mxu0 %v221
    %v319 = vpop.f32.mrf.mxu0
    %v320 = vadd.f32 0.0, %v319
    %321 = vmatmul.f32.gmra.mxu0 %v224
    %v322 = vpop.f32.mrf.mxu0
    %v323 = vadd.f32 0.0, %v322
    %324 = vmatmul.f32.gmra.mxu0 %v227
    %v325 = vpop.f32.mrf.mxu0
    %v326 = vadd.f32 0.0, %v325
    %327 = vdwg.mxu0
    %328 = vst.msk [vmem:[#allocation9 + $0x40] sm:$0xff] %vm194, %v317
    %329 = vst.msk [vmem:[#allocation9 + $0x48] sm:$0xff] %vm194, %v320
    %330 = vst.msk [vmem:[#allocation9 + $0x50] sm:$0xff] %vm194, %v323
    %331 = vst.msk [vmem:[#allocation9 + $0x58] sm:$0xff] %vm194, %v326
    %v332 = vld [vmem:[#allocation2 + $0x30] sm:$0xff]
    %v333 = vld [vmem:[#allocation2 + $0x38] sm:$0xff]
    %334 = vmatpush.msra.mxu0 0.0
    %335 = vmatpush.msra.mxu0 0.0
    %336 = vmatpush.msra.mxu0 0.0
    %337 = vmatpush.msra.mxu0 0.0
    %338 = vmatpush.msra.mxu0 0.0
    %339 = vmatpush.msra.mxu0 0.0
    %340 = vmatpush.msra.mxu0 0.0
    %341 = vmatpush.msra.mxu0 0.0
    %342 = vmatpush.msra.mxu0 0.0
    %343 = vmatpush.msra.mxu0 0.0
    %344 = vmatpush.msra.mxu0 0.0
    %345 = vmatpush.msra.mxu0 0.0
    %346 = vmatpush.msra.mxu0 0.0
    %347 = vmatpush.msra.mxu0 0.0
    %348 = vmatpush.msra.mxu0 %v333
    %349 = vmatpush.msra.mxu0 %v332
    %350 = vmatmul.f32.gmra.mxu0 %v218
    %v351 = vpop.f32.mrf.mxu0
    %v352 = vadd.f32 0.0, %v351
    %353 = vmatmul.f32.gmra.mxu0 %v221
    %v354 = vpop.f32.mrf.mxu0
    %v355 = vadd.f32 0.0, %v354
    %356 = vmatmul.f32.gmra.mxu0 %v224
    %v357 = vpop.f32.mrf.mxu0
    %v358 = vadd.f32 0.0, %v357
    %359 = vmatmul.f32.gmra.mxu0 %v227
    %v360 = vpop.f32.mrf.mxu0
    %v361 = vadd.f32 0.0, %v360
    %362 = vdwg.mxu0
    %363 = vst.msk [vmem:[#allocation9 + $0x60] sm:$0xff] %vm194, %v352
    %364 = vst.msk [vmem:[#allocation9 + $0x68] sm:$0xff] %vm194, %v355
    %365 = vst.msk [vmem:[#allocation9 + $0x70] sm:$0xff] %vm194, %v358
    %366 = vst.msk [vmem:[#allocation9 + $0x78] sm:$0xff] %vm194, %v361
    %v367 = vld [vmem:[#allocation2 + $0x40] sm:$0xff]
    %v368 = vld [vmem:[#allocation2 + $0x48] sm:$0xff]
    %369 = vmatpush.msra.mxu0 0.0
    %370 = vmatpush.msra.mxu0 0.0
    %371 = vmatpush.msra.mxu0 0.0
    %372 = vmatpush.msra.mxu0 0.0
    %373 = vmatpush.msra.mxu0 0.0
    %374 = vmatpush.msra.mxu0 0.0
    %375 = vmatpush.msra.mxu0 0.0
    %376 = vmatpush.msra.mxu0 0.0
    %377 = vmatpush.msra.mxu0 0.0
    %378 = vmatpush.msra.mxu0 0.0
    %379 = vmatpush.msra.mxu0 0.0
    %380 = vmatpush.msra.mxu0 0.0
    %381 = vmatpush.msra.mxu0 0.0
    %382 = vmatpush.msra.mxu0 0.0
    %383 = vmatpush.msra.mxu0 %v368
    %384 = vmatpush.msra.mxu0 %v367
    %385 = vmatmul.f32.gmra.mxu0 %v218
    %v386 = vpop.f32.mrf.mxu0
    %v387 = vadd.f32 0.0, %v386
    %388 = vmatmul.f32.gmra.mxu0 %v221
    %v389 = vpop.f32.mrf.mxu0
    %v390 = vadd.f32 0.0, %v389
    %391 = vmatmul.f32.gmra.mxu0 %v224
    %v392 = vpop.f32.mrf.mxu0
    %v393 = vadd.f32 0.0, %v392
    %394 = vmatmul.f32.gmra.mxu0 %v227
    %v395 = vpop.f32.mrf.mxu0
    %v396 = vadd.f32 0.0, %v395
    %397 = vdwg.mxu0
    %398 = vst.msk [vmem:[#allocation9 + $0x80] sm:$0xff] %vm194, %v387
    %399 = vst.msk [vmem:[#allocation9 + $0x88] sm:$0xff] %vm194, %v390
    %400 = vst.msk [vmem:[#allocation9 + $0x90] sm:$0xff] %vm194, %v393
    %401 = vst.msk [vmem:[#allocation9 + $0x98] sm:$0xff] %vm194, %v396
    %v402 = vld [vmem:[#allocation2 + $0x50] sm:$0xff]
    %v403 = vld [vmem:[#allocation2 + $0x58] sm:$0xff]
    %404 = vmatpush.msra.mxu0 0.0
    %405 = vmatpush.msra.mxu0 0.0
    %406 = vmatpush.msra.mxu0 0.0
    %407 = vmatpush.msra.mxu0 0.0
    %408 = vmatpush.msra.mxu0 0.0
    %409 = vmatpush.msra.mxu0 0.0
    %410 = vmatpush.msra.mxu0 0.0
    %411 = vmatpush.msra.mxu0 0.0
    %412 = vmatpush.msra.mxu0 0.0
    %413 = vmatpush.msra.mxu0 0.0
    %414 = vmatpush.msra.mxu0 0.0
    %415 = vmatpush.msra.mxu0 0.0
    %416 = vmatpush.msra.mxu0 0.0
    %417 = vmatpush.msra.mxu0 0.0
    %418 = vmatpush.msra.mxu0 %v403
    %419 = vmatpush.msra.mxu0 %v402
    %420 = vmatmul.f32.gmra.mxu0 %v218
    %v421 = vpop.f32.mrf.mxu0
    %v422 = vadd.f32 0.0, %v421
    %423 = vmatmul.f32.gmra.mxu0 %v221
    %v424 = vpop.f32.mrf.mxu0
    %v425 = vadd.f32 0.0, %v424
    %426 = vmatmul.f32.gmra.mxu0 %v224
    %v427 = vpop.f32.mrf.mxu0
    %v428 = vadd.f32 0.0, %v427
    %429 = vmatmul.f32.gmra.mxu0 %v227
    %v430 = vpop.f32.mrf.mxu0
    %v431 = vadd.f32 0.0, %v430
    %432 = vdwg.mxu0
    %433 = vst.msk [vmem:[#allocation9 + $0xa0] sm:$0xff] %vm194, %v422
    %434 = vst.msk [vmem:[#allocation9 + $0xa8] sm:$0xff] %vm194, %v425
    %435 = vst.msk [vmem:[#allocation9 + $0xb0] sm:$0xff] %vm194, %v428
    %436 = vst.msk [vmem:[#allocation9 + $0xb8] sm:$0xff] %vm194, %v431
    %v437 = vld [vmem:[#allocation2 + $0x60] sm:$0xff]
    %v438 = vld [vmem:[#allocation2 + $0x68] sm:$0xff]
    %439 = vmatpush.msra.mxu0 0.0
    %440 = vmatpush.msra.mxu0 0.0
    %441 = vmatpush.msra.mxu0 0.0
    %442 = vmatpush.msra.mxu0 0.0
    %443 = vmatpush.msra.mxu0 0.0
    %444 = vmatpush.msra.mxu0 0.0
    %445 = vmatpush.msra.mxu0 0.0
    %446 = vmatpush.msra.mxu0 0.0
    %447 = vmatpush.msra.mxu0 0.0
    %448 = vmatpush.msra.mxu0 0.0
    %449 = vmatpush.msra.mxu0 0.0
    %450 = vmatpush.msra.mxu0 0.0
    %451 = vmatpush.msra.mxu0 0.0
    %452 = vmatpush.msra.mxu0 0.0
    %453 = vmatpush.msra.mxu0 %v438
    %454 = vmatpush.msra.mxu0 %v437
    %455 = vmatmul.f32.gmra.mxu0 %v218
    %v456 = vpop.f32.mrf.mxu0
    %v457 = vadd.f32 0.0, %v456
    %458 = vmatmul.f32.gmra.mxu0 %v221
    %v459 = vpop.f32.mrf.mxu0
    %v460 = vadd.f32 0.0, %v459
    %461 = vmatmul.f32.gmra.mxu0 %v224
    %v462 = vpop.f32.mrf.mxu0
    %v463 = vadd.f32 0.0, %v462
    %464 = vmatmul.f32.gmra.mxu0 %v227
    %v465 = vpop.f32.mrf.mxu0
    %v466 = vadd.f32 0.0, %v465
    %467 = vdwg.mxu0
    %468 = vst.msk [vmem:[#allocation9 + $0xc0] sm:$0xff] %vm194, %v457
    %469 = vst.msk [vmem:[#allocation9 + $0xc8] sm:$0xff] %vm194, %v460
    %470 = vst.msk [vmem:[#allocation9 + $0xd0] sm:$0xff] %vm194, %v463
    %471 = vst.msk [vmem:[#allocation9 + $0xd8] sm:$0xff] %vm194, %v466
    %v472 = vld [vmem:[#allocation2 + $0x70] sm:$0xff]
    %v473 = vld [vmem:[#allocation2 + $0x78] sm:$0xff]
    %474 = vmatpush.msra.mxu0 0.0
    %475 = vmatpush.msra.mxu0 0.0
    %476 = vmatpush.msra.mxu0 0.0
    %477 = vmatpush.msra.mxu0 0.0
    %478 = vmatpush.msra.mxu0 0.0
    %479 = vmatpush.msra.mxu0 0.0
    %480 = vmatpush.msra.mxu0 0.0
    %481 = vmatpush.msra.mxu0 0.0
    %482 = vmatpush.msra.mxu0 0.0
    %483 = vmatpush.msra.mxu0 0.0
    %484 = vmatpush.msra.mxu0 0.0
    %485 = vmatpush.msra.mxu0 0.0
    %486 = vmatpush.msra.mxu0 0.0
    %487 = vmatpush.msra.mxu0 0.0
    %488 = vmatpush.msra.mxu0 %v473
    %489 = vmatpush.msra.mxu0 %v472
    %490 = vmatmul.f32.gmra.mxu0 %v218
    %v491 = vpop.f32.mrf.mxu0
    %v492 = vadd.f32 0.0, %v491
    %493 = vmatmul.f32.gmra.mxu0 %v221
    %v494 = vpop.f32.mrf.mxu0
    %v495 = vadd.f32 0.0, %v494
    %496 = vmatmul.f32.gmra.mxu0 %v224
    %v497 = vpop.f32.mrf.mxu0
    %v498 = vadd.f32 0.0, %v497
    %499 = vmatmul.f32.gmra.mxu0 %v227
    %v500 = vpop.f32.mrf.mxu0
    %v501 = vadd.f32 0.0, %v500
    %502 = vdwg.mxu0
    %503 = vst.msk [vmem:[#allocation9 + $0xe0] sm:$0xff] %vm194, %v492
    %504 = vst.msk [vmem:[#allocation9 + $0xe8] sm:$0xff] %vm194, %v495
    %505 = vst.msk [vmem:[#allocation9 + $0xf0] sm:$0xff] %vm194, %v498
    %506 = vst.msk [vmem:[#allocation9 + $0xf8] sm:$0xff] %vm194, %v501
    // Predicated region
    $region26: #{interpolate.1} parent=1 // pred_check
      _
    $region27: #{interpolate.1} parent=1 // pred_check_branch
      %508 = sbr.rel (0) target = $region29
    $region28: #{interpolate.1} parent=1 // pred_region
      %510 = vsyncadd [#allocation5], 0
      %s511 = sshll.u32 [#allocation9], 4
      %s512 = int_to_ptr.vmem [resolvable:$true] %s511
      %s513 = sshll.u32 %s3, 4
      %s514 = int_to_ptr.hbm [resolvable:$true] %s513
      %519 = dma.vmem_to_hbm [thread:$0]  %s512, 4096, %s514, [#allocation5], 128, 128, 8
    $region29: #{interpolate.1} parent=1 // pred_fallthru
      _
    // Predicated region
    $region30: #{interpolate.1} parent=1 // pred_check
      _
    $region31: #{interpolate.1} parent=1 // pred_check_branch
      %521 = sbr.rel (0) target = $region33
    $region32: #{interpolate.1} parent=1 // pred_region
      %523 = dma.done [#allocation5], 4096
    $region33: #{interpolate.1} parent=1 // pred_fallthru
      _
    %524 = vsyncpa [#allocation4], 1
    %525 = vsyncpa [#allocation7], 1
    %526 = vsyncpa [#allocation5], 1

</llo_original>
